<compile_context>
chip_gen: v5e
topology: v5e:2x2
jax: 0.10.0
libtpu: 0.0.40
codegen_flags: <defaults>
</compile_context>

<pallas_src>
import math

import jax
import jax.numpy as jnp
from jax.experimental import pallas as pl
from jax.experimental.pallas import tpu as pltpu

_LANES = 128
_SUB = 8                      # sublanes of one f32 vreg
_NUM_SPLITS = 2               # independent partial sums (megacore-friendly; no-op on 1-TC chips)
_MIN_PALLAS_NUMEL = 131072    # below this, plain XLA beats kernel-launch/pipeline overhead


def _round_up(x, m):
    return ((x + m - 1) // m) * m


def _tile_bytes_per_stream():
    """~2 MiB/stream/buffer on v5e/v6e (weighted f32: 3 x 2 x 2 MiB = 12 MiB, fits the
    16 MiB v5e scoped-VMEM default); 4 MiB on v7x-class parts, where ~3.2 TB/s HBM makes
    a 2 MiB step too short to amortize the fixed per-grid-step overhead."""
    try:
        info = pltpu.get_tpu_info()
        if info.vmem_capacity_bytes <= 64 * 1024 * 1024:   # v7x-class (64 MiB per TC)
            return 4 * 1024 * 1024
    except Exception:
        pass
    return 2 * 1024 * 1024


def _make_mse_sum_kernel(rows, tile_rows, chunks_per_split, total_chunks,
                         weighted, padded_grid):
    """Accumulate sum((src - tgt)^2 [* w]) into a lane-dense (8,128) f32 output block
    per split.  The output block is resident across the 'arbitrary' j axis, so we
    accumulate directly into out_ref (no scratch, no final copy)."""
    last_chunk = total_chunks - 1
    ragged_tail = (rows % tile_rows) != 0   # static: last chunk extends past `rows`

    def kernel(src_ref, tgt_ref, *rest):
        if weighted:
            w_ref, out_ref = rest
        else:
            (out_ref,) = rest
        s = pl.program_id(0)
        j = pl.program_id(1)
        g = s * chunks_per_split + j         # global chunk index

        @pl.when(j == 0)
        def _():
            out_ref[...] = jnp.zeros_like(out_ref)

        def accumulate():
            d = src_ref[...].astype(jnp.float32) - tgt_ref[...].astype(jnp.float32)
            dd = d * d
            if weighted:
                dd = dd * w_ref[...].astype(jnp.float32)

            def add(vals):
                r = vals.shape[0]
                if r % _SUB == 0:
                    # (r,128) -> (r/8, 8, 128) is tile-preserving, so this folds into
                    # pure vreg (VALU) adds with no VMEM temporary.
                    out_ref[...] += jnp.sum(vals.reshape(-1, _SUB, _LANES), axis=0)
                else:
                    # Single-chunk full-dim block whose row count isn't a multiple of 8.
                    out_ref[0:1, :] += jnp.sum(vals, axis=0, keepdims=True)

            if ragged_tail:
                # Mask only the tail chunk: rows past the logical end of the stream
                # (the out-of-bounds part of the edge block holds undefined data).
                @pl.when(g == last_chunk)
                def _():
                    row_ids = g * tile_rows + jax.lax.broadcasted_iota(
                        jnp.int32, dd.shape, 0)
                    add(jnp.where(row_ids < rows, dd, 0.0))

                @pl.when(g != last_chunk)
                def _():
                    add(dd)
            else:
                add(dd)

        if padded_grid:
            # At most num_splits-1 grid steps fall past the last real chunk; they fetch
            # a clamped (already-seen) block but skip accumulation entirely.
            @pl.when(g < total_chunks)
            def _():
                accumulate()
        else:
            accumulate()

    return kernel


def _sum_sq_pallas(src_flat, tgt_flat, w_flat):
    """sum((src-tgt)^2 [* w]) over flat arrays whose length is a multiple of 128."""
    n = src_flat.shape[0]
    rows = n // _LANES

    inputs = (src_flat, tgt_flat) if w_flat is None else (src_flat, tgt_flat, w_flat)
    itemsizes = [jnp.dtype(a.dtype).itemsize for a in inputs]
    max_item, min_item = max(itemsizes), min(itemsizes)

    # Tile: ~2 MiB (4 MiB on v7x) per stream per buffer; round to the sublane-packing
    # granularity of the narrowest dtype (8 rows f32 / 16 rows bf16 / 32 rows fp8).
    sub_mult = _SUB * max(1, 4 // min_item)
    target_rows = _round_up(_tile_bytes_per_stream() // (_LANES * max_item), sub_mult)
    if rows <= target_rows:
        tile_rows = rows              # single full-dim block: exact fit, no masking
    else:
        tile_rows = target_rows

    total_chunks = pl.cdiv(rows, tile_rows)
    num_splits = _NUM_SPLITS if total_chunks >= _NUM_SPLITS else 1
    chunks_per_split = pl.cdiv(total_chunks, num_splits)
    padded_grid = num_splits * chunks_per_split != total_chunks

    views = tuple(a.reshape(rows, _LANES) for a in inputs)   # free reshape (contiguous)

    def in_index_map(s, j):
        g = s * chunks_per_split + j
        if padded_grid:
            g = jnp.minimum(g, total_chunks - 1)   # keep no-op steps in-bounds
        return (g, 0)

    in_spec = pl.BlockSpec((tile_rows, _LANES), in_index_map)
    out_spec = pl.BlockSpec((_SUB, _LANES), lambda s, j: (s, 0))

    kernel = _make_mse_sum_kernel(rows, tile_rows, chunks_per_split, total_chunks,
                                  weighted=w_flat is not None,
                                  padded_grid=padded_grid)

    tile_bytes = sum(tile_rows * _LANES * isz for isz in itemsizes)
    vmem_limit = 2 * tile_bytes + (1 << 20)        # double-buffered inputs + margin
    vmem_limit = min(max(vmem_limit, 16 * 1024 * 1024), 48 * 1024 * 1024)

    partials = pl.pallas_call(
        kernel,
        out_shape=jax.ShapeDtypeStruct((num_splits * _SUB, _LANES), jnp.float32),
        grid_spec=pltpu.PrefetchScalarGridSpec(
            num_scalar_prefetch=0,
            grid=(num_splits, chunks_per_split),
            in_specs=[in_spec] * len(views),
            out_specs=out_spec,
        ),
        compiler_params=pltpu.CompilerParams(
            dimension_semantics=("parallel", "arbitrary"),
            vmem_limit_bytes=vmem_limit),
    )(*views)

    # Tiny final cross-lane reduce of the lane-dense partials (left to XLA).
    return jnp.sum(partials)


def _sum_sq_xla(src, tgt, weight):
    d = src.astype(jnp.float32) - tgt.astype(jnp.float32)
    dd = d * d
    if weight is not None:
        dd = dd * weight.astype(jnp.float32)
    return jnp.sum(dd)


def mse_loss_pallas(x_src, x_tgt, weight=None, scale_factor=1.0, reduction='mean',
                    lowest_loss_value=None, min_pallas_numel=_MIN_PALLAS_NUMEL):
    assert x_src.shape == x_tgt.shape, 'invalid shape of x_src or x_tgt'
    if weight is not None:
        assert weight.shape == x_src.shape, 'invalid shape of weight'
    if reduction not in ('mean', 'sum'):
        # TODO(synk): reduction='none' returns the full elementwise loss map; only the
        # reduced ('mean'/'sum') forward paths are implemented here.
        raise NotImplementedError("reduction must be 'mean' or 'sum'")

    numel = math.prod(x_src.shape)

    if numel < max(min_pallas_numel, _LANES):
        # Small-input fallback: launch + pipeline fixed costs dominate tiny tensors.
        total = _sum_sq_xla(x_src, x_tgt, weight)
    else:
        src_flat = x_src.reshape(-1)          # free: contiguous row-major flatten
        tgt_flat = x_tgt.reshape(-1)
        w_flat = None if weight is None else weight.reshape(-1)
        rem = numel % _LANES
        bulk = numel - rem
        if rem == 0:
            total = _sum_sq_pallas(src_flat, tgt_flat, w_flat)
        else:
            # Ragged numel: 128-aligned bulk through the kernel, the <128-element
            # remainder in plain XLA.  (No host-side zero-padding of the streams.)
            total = _sum_sq_pallas(
                src_flat[:bulk], tgt_flat[:bulk],
                None if w_flat is None else w_flat[:bulk])
            total = total + _sum_sq_xla(
                src_flat[bulk:], tgt_flat[bulk:],
                None if w_flat is None else w_flat[bulk:])

    if reduction == 'mean':
        # Weighted mean divides by numel (mmseg/ssseg reduce with avg_factor=None),
        # not by weight.sum().
        loss = total / jnp.float32(numel)
    else:  # 'sum'
        loss = total

    loss = loss * jnp.float32(scale_factor)
    if lowest_loss_value is not None:
        llv = jnp.float32(lowest_loss_value)
        loss = jnp.abs(loss - llv) + llv
    return loss


class MSELoss:
    """Thin functional mirror of the PyTorch module."""

    def __init__(self, scale_factor=1.0, reduction='mean', lowest_loss_value=None):
        self.scale_factor = scale_factor
        self.reduction = reduction
        self.lowest_loss_value = lowest_loss_value

    def __call__(self, x_src, x_tgt, weight=None, **kw):
        return mse_loss_pallas(x_src, x_tgt, weight=weight,
                               scale_factor=self.scale_factor,
                               reduction=self.reduction,
                               lowest_loss_value=self.lowest_loss_value, **kw)


if __name__ == "__main__":
    key = jax.random.PRNGKey(0)
    k1, k2, k3, k4, k5 = jax.random.split(key, 5)

    # --- default MSELoss(): NCHW input, unweighted, mean reduction ------------
    x_src = jax.random.normal(k1, (2, 4, 16, 16), dtype=jnp.float32)
    x_tgt = jax.random.normal(k2, (2, 4, 16, 16), dtype=jnp.float32)
    weight = jax.random.uniform(k3, (2, 4, 16, 16), dtype=jnp.float32)

    out = jax.block_until_ready(
        mse_loss_pallas(x_src, x_tgt, min_pallas_numel=0))   # force the kernel path
    ref = jnp.mean((x_src - x_tgt) ** 2)
    assert jnp.allclose(out, ref, rtol=1e-5, atol=1e-6), (out, ref)

    # --- weighted + scale_factor + lowest_loss_value --------------------------
    loss_mod = MSELoss(scale_factor=0.5, reduction='mean', lowest_loss_value=0.1)
    out_w = jax.block_until_ready(
        loss_mod(x_src, x_tgt, weight=weight, min_pallas_numel=0))
    ref_w = jnp.mean((x_src - x_tgt) ** 2 * weight) * 0.5
    ref_w = jnp.abs(ref_w - 0.1) + 0.1
    assert jnp.allclose(out_w, ref_w, rtol=1e-5, atol=1e-6), (out_w, ref_w)

    # --- ragged numel (bulk kernel + <128 remainder in XLA), weighted, sum ----
    r1 = jax.random.normal(k4, (3, 5, 7, 11), dtype=jnp.float32)
    r2 = jax.random.normal(k5, (3, 5, 7, 11), dtype=jnp.float32)
    rw = jax.random.uniform(k3, (3, 5, 7, 11), dtype=jnp.float32)
    out_r = jax.block_until_ready(
        mse_loss_pallas(r1, r2, weight=rw, reduction='sum', min_pallas_numel=0))
    ref_r = jnp.sum((r1 - r2) ** 2 * rw)
    assert jnp.allclose(out_r, ref_r, rtol=1e-5, atol=1e-5), (out_r, ref_r)

    # --- bf16 inputs stay bf16 in HBM; cast to f32 inside the kernel ----------
    b1 = x_src.astype(jnp.bfloat16)
    b2 = x_tgt.astype(jnp.bfloat16)
    out_b = jax.block_until_ready(mse_loss_pallas(b1, b2, min_pallas_numel=0))
    ref_b = jnp.mean((b1.astype(jnp.float32) - b2.astype(jnp.float32)) ** 2)
    assert jnp.allclose(out_b, ref_b, rtol=1e-4, atol=1e-6), (out_b, ref_b)

    # --- larger input: multi-chunk grid, 2-way split, skipped step, tail mask -
    big1 = jax.random.normal(k1, (8, 9, 125, 128), dtype=jnp.float32)   # rows = 9000
    big2 = jax.random.normal(k2, (8, 9, 125, 128), dtype=jnp.float32)
    out_big = jax.block_until_ready(mse_loss_pallas(big1, big2))
    ref_big = jnp.mean((big1 - big2) ** 2)
    assert jnp.allclose(out_big, ref_big, rtol=1e-4, atol=1e-6), (out_big, ref_big)

    # --- tiny input via default threshold exercises the plain-XLA fallback ----
    t1, t2 = x_src[:1, :1], x_tgt[:1, :1]
    out_t = jax.block_until_ready(mse_loss_pallas(t1, t2))
    ref_t = jnp.mean((t1 - t2) ** 2)
    assert jnp.allclose(out_t, ref_t, rtol=1e-5, atol=1e-6), (out_t, ref_t)

    print("KERNEL_OK")
</pallas_src>

<mosaic_0001>
module attributes {stable_mosaic.version = 11 : i64} {
  func.func @kernel(%arg0: i32, %arg1: i32, %arg2: memref<16x128xf32, #tpu.memory_space<vmem>>, %arg3: memref<16x128xf32, #tpu.memory_space<vmem>>, %arg4: memref<8x128xf32, #tpu.memory_space<vmem>>) attributes {dimension_semantics = [#tpu.dimension_semantics<parallel>, #tpu.dimension_semantics<arbitrary>], iteration_bounds = array<i64: 1, 1>, scalar_prefetch = 0 : i64, scratch_operands = 0 : i64, tpu.core_type = #tpu.core_type<tc>, window_params = [{transform_indices = @transform_0, window_bounds = array<i64: 16, 128>}, {transform_indices = @transform_1, window_bounds = array<i64: 16, 128>}, {transform_indices = @transform_2, window_bounds = array<i64: 8, 128>}]} {
    %c0_i32 = arith.constant 0 : i32
    %0 = arith.cmpi eq, %arg1, %c0_i32 : i32
    %1 = arith.extui %0 : i1 to i32
    %c0_i32_0 = arith.constant 0 : i32
    %2 = arith.cmpi ne, %1, %c0_i32_0 : i32
    scf.if %2 {
      %cst_8 = arith.constant 0.000000e+00 : f32
      %12 = vector.broadcast %cst_8 : f32 to vector<8x128xf32>
      %c0_9 = arith.constant 0 : index
      %c0_10 = arith.constant 0 : index
      %13 = vector.load %arg4[%c0_9, %c0_10] : memref<8x128xf32, #tpu.memory_space<vmem>>, vector<8x128xf32>
      tpu.vector_store %arg4[%c0_9, %c0_10], %12 {strides = array<i32>} : memref<8x128xf32, #tpu.memory_space<vmem>>, vector<8x128xf32>,
    } else {
    }
    %c0 = arith.constant 0 : index
    %c0_1 = arith.constant 0 : index
    %3 = vector.load %arg2[%c0, %c0_1] : memref<16x128xf32, #tpu.memory_space<vmem>>, vector<16x128xf32>
    %c0_2 = arith.constant 0 : index
    %c0_3 = arith.constant 0 : index
    %4 = vector.load %arg3[%c0_2, %c0_3] : memref<16x128xf32, #tpu.memory_space<vmem>>, vector<16x128xf32>
    %5 = arith.subf %3, %4 : vector<16x128xf32>
    %6 = arith.mulf %5, %5 : vector<16x128xf32>
    %c0_4 = arith.constant 0 : index
    %c0_5 = arith.constant 0 : index
    %7 = vector.load %arg4[%c0_4, %c0_5] : memref<8x128xf32, #tpu.memory_space<vmem>>, vector<8x128xf32>
    %8 = vector.shape_cast %6 : vector<16x128xf32> to vector<2x8x128xf32>
    %cst = arith.constant dense<0.000000e+00> : vector<8x128xf32>
    %9 = vector.multi_reduction <add>, %8, %cst [0] : vector<2x8x128xf32> to vector<8x128xf32>
    %10 = arith.addf %7, %9 : vector<8x128xf32>
    %c0_6 = arith.constant 0 : index
    %c0_7 = arith.constant 0 : index
    %11 = vector.load %arg4[%c0_6, %c0_7] : memref<8x128xf32, #tpu.memory_space<vmem>>, vector<8x128xf32>
    tpu.vector_store %arg4[%c0_6, %c0_7], %10 {strides = array<i32>} : memref<8x128xf32, #tpu.memory_space<vmem>>, vector<8x128xf32>,
    return
  }
  func.func @transform_0(%arg0: i32, %arg1: i32) -> (i32, i32) {
    %c1_i32 = arith.constant 1 : i32
    %0 = arith.muli %arg0, %c1_i32 : i32
    %1 = arith.addi %0, %arg1 : i32
    %c0_i32 = arith.constant 0 : i32
    %c0_i32_0 = arith.constant 0 : i32
    return %1, %c0_i32 : i32, i32
  }
  func.func @transform_1(%arg0: i32, %arg1: i32) -> (i32, i32) {
    %c1_i32 = arith.constant 1 : i32
    %0 = arith.muli %arg0, %c1_i32 : i32
    %1 = arith.addi %0, %arg1 : i32
    %c0_i32 = arith.constant 0 : i32
    %c0_i32_0 = arith.constant 0 : i32
    return %1, %c0_i32 : i32, i32
  }
  func.func @transform_2(%arg0: i32, %arg1: i32) -> (i32, i32) {
    %c0_i32 = arith.constant 0 : i32
    %c0_i32_0 = arith.constant 0 : i32
    return %arg0, %c0_i32 : i32, i32
  }
}

</mosaic_0001>

<llo_original>
// kernel: tpu_custom_call.1
$region0: #{tpu_custom_call.1}
  #allocation0 [shape = 'u32[]', space=smem, size = 0x4, offset = 0x4, fixed_abs, tag = 'smem constant byte address 0x4 - core index']
  #allocation1 [shape = 'u32[72,128]{1,0:T(1,128)}', space=vmem, size = 0x9000, scoped, tag = 'internal scratch']
  %s0 = inlined_call_operand.hbm [shape: f32[16,128], index: 0, kind: input, shape index: {}]
  %s1 = inlined_call_operand.hbm [shape: f32[16,128], index: 1, kind: input, shape index: {}]
  %s2 = inlined_call_operand.hbm [shape: f32[8,128], index: 2, kind: output, shape index: {}]
  %s3 = sld [smem:[#allocation0]]
  $region30: #{tpu_custom_call.1} parent=0
    _
  %s5 = ssub.s32 1, %s3
  %s6 = scalar_select 0, %s5, %s3
  $region1: #{tpu_custom_call.1} parent=0
    #allocation2 [shape = 'u8[8192]{0}', space=vmem, size = 0x2000, scoped, tag = 'input window, operand 0, single buffered']
    #allocation3 [shape = 's32[1]{0}', space=sflag, size = 0x4, scoped, tag = 'scoped memory for tpu_custom_call.1']
    #allocation4 [shape = 's32[1]{0}', space=sflag, size = 0x4, scoped, tag = 'scoped memory for tpu_custom_call.1']
    #allocation5 [shape = 'u8[8192]{0}', space=vmem, size = 0x2000, scoped, tag = 'input window, operand 1, single buffered']
    #allocation6 [shape = 's32[1]{0}', space=sflag, size = 0x4, scoped, tag = 'scoped memory for tpu_custom_call.1']
    #allocation7 [shape = 'u8[4096]{0}', space=vmem, size = 0x1000, scoped, tag = 'output window, operand 0, single buffered']
    %7 = vsyncpa [#allocation3], 0
    %8 = vsyncpa [#allocation6], 0
    %9 = vsyncpa [#allocation4], 0
    // Predicated region
    $region2: #{tpu_custom_call.1} parent=1 // pred_check
      _
    $region3: #{tpu_custom_call.1} parent=1 // pred_check_branch
      %11 = sbr.rel (0) target = $region5
    $region4: #{tpu_custom_call.1} parent=1 // pred_region
      %s12 = sadd.s32 0, 0
      %s13 = smul.u32 2, %s12
      %15 = vsyncadd [#allocation3], 0
      %s16 = smul.addr %s13, 8
      %s17 = scalar_lea.hbm %s0, %s16
      %s18 = sshll.u32 %s17, 4
      %s19 = int_to_ptr.hbm [resolvable:$true] %s18
      %s20 = sshll.u32 [#allocation2], 4
      %s21 = int_to_ptr.vmem [resolvable:$true] %s20
      %26 = dma.hbm_to_vmem [thread:$0]  %s19, 256, %s21, [#allocation3], 128, 128, 8
    $region5: #{tpu_custom_call.1} parent=1 // pred_fallthru
      _
    // Predicated region
    $region6: #{tpu_custom_call.1} parent=1 // pred_check
      _
    $region7: #{tpu_custom_call.1} parent=1 // pred_check_branch
      %28 = sbr.rel (0) target = $region9
    $region8: #{tpu_custom_call.1} parent=1 // pred_region
      %s29 = sadd.s32 0, 0
      %s30 = smul.u32 2, %s29
      %32 = vsyncadd [#allocation6], 0
      %s33 = smul.addr %s30, 8
      %s34 = scalar_lea.hbm %s1, %s33
      %s35 = sshll.u32 %s34, 4
      %s36 = int_to_ptr.hbm [resolvable:$true] %s35
      %s37 = sshll.u32 [#allocation5], 4
      %s38 = int_to_ptr.vmem [resolvable:$true] %s37
      %43 = dma.hbm_to_vmem [thread:$0]  %s36, 256, %s38, [#allocation6], 128, 128, 8
    $region9: #{tpu_custom_call.1} parent=1 // pred_fallthru
      _
    // Predicated region
    $region10: #{tpu_custom_call.1} parent=1 // pred_check
      _
    $region11: #{tpu_custom_call.1} parent=1 // pred_check_branch
      %45 = sbr.rel (0) target = $region13
    $region12: #{tpu_custom_call.1} parent=1 // pred_region
      %47 = dma.done [#allocation3], 256
    $region13: #{tpu_custom_call.1} parent=1 // pred_fallthru
      _
    // Predicated region
    $region14: #{tpu_custom_call.1} parent=1 // pred_check
      _
    $region15: #{tpu_custom_call.1} parent=1 // pred_check_branch
      %49 = sbr.rel (0) target = $region17
    $region16: #{tpu_custom_call.1} parent=1 // pred_region
      %51 = dma.done [#allocation6], 256
    $region17: #{tpu_custom_call.1} parent=1 // pred_fallthru
      _
    %s52 = sadd.s32 0, 0
    %s53 = smul.u32 2, %s52
    %s54 = sadd.s32 0, 0
    %s55 = smul.u32 2, %s54
    %p56 = scmp.eq.s32.totalorder 0, 0
    // Predicated region
    $region18: #{tpu_custom_call.1} parent=1 // pred_check
      %p57 = pneg %p56
    $region19: #{tpu_custom_call.1} parent=1 // pred_check_branch
      %59 = sbr.rel (%p57) target = $region21
    $region20: #{tpu_custom_call.1} parent=1 // pred_region
      %60 = vst [vmem:[#allocation7] sm:$0xff] 0.0
    $region21: #{tpu_custom_call.1} parent=1 // pred_fallthru
      _
    %v61 = vld [vmem:[#allocation2] sm:$0xff]
    %v62 = vld [vmem:[#allocation2 + $0x8] sm:$0xff]
    %v63 = vld [vmem:[#allocation5] sm:$0xff]
    %v64 = vld [vmem:[#allocation5 + $0x8] sm:$0xff]
    %v65 = vsub.f32 %v61, %v63
    %v66 = vsub.f32 %v62, %v64
    %v67 = vmul.f32 %v65, %v65
    %v68 = vmul.f32 %v66, %v66
    %v69 = vld [vmem:[#allocation7] sm:$0xff]
    %v70 = vadd.f32 %v67, %v68
    %v71 = vadd.f32 %v69, %v70
    %72 = vst [vmem:[#allocation7] sm:$0xff] %v71
    // Predicated region
    $region22: #{tpu_custom_call.1} parent=1 // pred_check
      _
    $region23: #{tpu_custom_call.1} parent=1 // pred_check_branch
      %74 = sbr.rel (0) target = $region25
    $region24: #{tpu_custom_call.1} parent=1 // pred_region
      %76 = vsyncadd [#allocation4], 0
      %s78 = sshll.u32 [#allocation7], 4
      %s79 = int_to_ptr.vmem [resolvable:$true] %s78
      %s80 = sshll.u32 %s2, 4
      %s81 = int_to_ptr.hbm [resolvable:$true] %s80
      %83 = dma.vmem_to_hbm [thread:$0]  %s79, 128, %s81, [#allocation4]
    $region25: #{tpu_custom_call.1} parent=1 // pred_fallthru
      _
    // Predicated region
    $region26: #{tpu_custom_call.1} parent=1 // pred_check
      _
    $region27: #{tpu_custom_call.1} parent=1 // pred_check_branch
      %85 = sbr.rel (0) target = $region29
    $region28: #{tpu_custom_call.1} parent=1 // pred_region
      %87 = dma.done [#allocation4], 128
    $region29: #{tpu_custom_call.1} parent=1 // pred_fallthru
      _
    %88 = vsyncpa [#allocation3], 1
    %89 = vsyncpa [#allocation6], 1
    %90 = vsyncpa [#allocation4], 1

</llo_original>
